<compile_context>
chip_gen: v6e
topology: v6e:2x2x1
jax: 0.10.0
libtpu: 0.0.40
codegen_flags: <defaults>
</compile_context>

<pallas_src>
import jax
import jax.numpy as jnp
from jax.experimental import pallas as pl
from jax.experimental.pallas import tpu as pltpu


def _sigmoid_f32(z):
    # sigmoid(z) = 0.5 * tanh(z/2) + 0.5  -> one EUP op + VPU mul/add (VPU has slack),
    # vs. exp + reciprocal (2 EUP ops) which made the single EUP slot the bottleneck.
    return 0.5 * jnp.tanh(0.5 * z) + 0.5


def _net_kernel(x_ref, w1t_ref, w1_ref, b1_ref, y_ref, h_ref):
    x = x_ref[...]                                           # [tm, Ip]  (bf16)

    # fc1: [tm, Ip] @ [Ip, Hp] — canonical MXU matmul, f32 accumulation.
    z1 = jnp.dot(x, w1t_ref[...], preferred_element_type=jnp.float32)
    h = _sigmoid_f32(z1 + b1_ref[...])                       # f32 [tm, Hp]
    h_ref[...] = h.astype(h_ref.dtype)

    # fc2 (tied weights, no bias): [tm, Hp] @ [Hp, Ip] — canonical MXU matmul.
    z2 = jnp.dot(h.astype(w1_ref.dtype), w1_ref[...],
                 preferred_element_type=jnp.float32)
    y_ref[...] = _sigmoid_f32(z2).astype(y_ref.dtype)


def _round_up(x, m):
    return ((x + m - 1) // m) * m


def _vmem_bytes(tm, Ip, Hp, out_bytes):
    # Conservative estimate: everything double-buffered (the Buffered(1) weight
    # specs halve the weight term when supported).
    w = 2 * (Ip * Hp * 2) * 2            # W1 + W1^T, bf16
    x_ = 2 * tm * Ip * 2                 # x tiles, bf16
    outs = 2 * tm * (Ip + Hp) * out_bytes
    bias = 2 * Hp * 4
    return w + x_ + outs + bias


_VMEM_TILE_BUDGET = 48 * 1024 * 1024     # headroom under v7x's 64 MiB per core


def _pick_tm(B, Ip, Hp, out_bytes):
    tm = 512
    # Guarantee >= 2 batch tiles whenever possible so ("parallel",) can shard
    # the grid across v7x's two TensorCores.
    while tm > 8 and pl.cdiv(B, tm) < 2:
        tm //= 2
    tm = max(8, min(tm, _round_up(B, 8)))
    # Shrink until the working set fits the VMEM budget.
    while tm > 8 and _vmem_bytes(tm, Ip, Hp, out_bytes) > _VMEM_TILE_BUDGET:
        tm //= 2
    return tm


def net_forward(x, w1, b1, *, out_dtype=jnp.bfloat16, compute_dtype=jnp.bfloat16):
    """Forward pass of `Net`.

    x:  [B, InputDim],  w1: [HiddenNum, InputDim] (fc1.weight), b1: [HiddenNum].
    Returns (Y, X1) with Y: [B, InputDim] (tied weights force OutputDim==InputDim)
    and X1: [B, HiddenNum].

    NOTE: MXU operands are cast to `compute_dtype` (bf16, f32 accumulation) and the
    outputs are stored in `out_dtype` (bf16 by default, ~half the HBM traffic).
    Pass out_dtype=jnp.float32 if callers need f32 outputs.
    """
    B, in_dim = x.shape
    hid, in_dim_w = w1.shape
    assert in_dim == in_dim_w, "tied weights require fc2.weight = fc1.weight.T"

    Ip = _round_up(in_dim, 128)
    Hp = _round_up(hid, 128)
    aligned = (Ip == in_dim) and (Hp == hid)

    xc = x.astype(compute_dtype)
    w1c = w1.astype(compute_dtype)
    if aligned:
        # Fast path: no host-side pad copy, no output slice.
        xp, w1p = xc, w1c
        b1p = b1.astype(jnp.float32).reshape(1, hid)
    else:
        # Zero padding is inert for the *sliced* outputs: padded input columns meet
        # zero weight columns and padded hidden units have zero rows in W1, so they
        # contribute nothing to fc2. (Padded regions of the raw kernel outputs hold
        # sigmoid(0)=0.5 and are sliced off below — nothing may rely on them.)
        xp = jnp.zeros((B, Ip), compute_dtype).at[:, :in_dim].set(xc)
        w1p = jnp.zeros((Hp, Ip), compute_dtype).at[:hid, :in_dim].set(w1c)
        b1p = jnp.zeros((1, Hp), jnp.float32).at[0, :hid].set(b1.astype(jnp.float32))
    w1t = w1p.T                          # [Ip, Hp]; transposed once by XLA, not per tile.

    out_bytes = jnp.dtype(out_dtype).itemsize
    tm = _pick_tm(B, Ip, Hp, out_bytes)
    grid = (pl.cdiv(B, tm),)             # batch remainder handled by a masked edge tile.

    vmem_needed = _vmem_bytes(tm, Ip, Hp, out_bytes)
    vmem_limit = int(min(64 * 1024 * 1024, max(vmem_needed + (2 << 20), 16 << 20)))

    cost = pl.CostEstimate(
        flops=4 * B * Ip * Hp,                        # two matmuls
        transcendentals=B * (Ip + Hp),                # one tanh per output element
        bytes_accessed=(B * Ip * 2 + 2 * Ip * Hp * 2 + Hp * 4
                        + B * (Ip + Hp) * out_bytes),
    )

    # TODO(synk): once Hp*Ip weights no longer fit comfortably in VMEM (esp. v7x's
    # 64 MiB/core), add a K/H reduction grid axis with a VMEM f32 accumulator and
    # pl.when init/finalize instead of keeping both weight orientations resident.

    def _call(weight_pipeline_mode):
        wkw = {} if weight_pipeline_mode is None else dict(pipeline_mode=weight_pipeline_mode)
        return pl.pallas_call(
            _net_kernel,
            out_shape=(
                jax.ShapeDtypeStruct((B, Ip), out_dtype),   # Y  (feature-padded iff not aligned)
                jax.ShapeDtypeStruct((B, Hp), out_dtype),   # X1
            ),
            grid=grid,
            in_specs=[
                pl.BlockSpec((tm, Ip), lambda i: (i, 0)),          # x: batch-tiled
                pl.BlockSpec((Ip, Hp), lambda i: (0, 0), **wkw),   # W1^T: VMEM-resident
                pl.BlockSpec((Hp, Ip), lambda i: (0, 0), **wkw),   # W1:   VMEM-resident
                pl.BlockSpec((1, Hp), lambda i: (0, 0), **wkw),    # b1:   VMEM-resident
            ],
            out_specs=(
                pl.BlockSpec((tm, Ip), lambda i: (i, 0)),
                pl.BlockSpec((tm, Hp), lambda i: (i, 0)),
            ),
            compiler_params=pltpu.CompilerParams(
                dimension_semantics=("parallel",),     # both TCs on v7x (grid has >=2 tiles)
                vmem_limit_bytes=vmem_limit),
            cost_estimate=cost,
        )(xp, w1t, w1p, b1p)

    try:
        # Loop-invariant weights/bias only need one VMEM buffer (saves weight VMEM).
        y_p, h_p = _call(pl.Buffered(1))
    except Exception:
        # Fallback for JAX versions that reject single-buffered pipeline_mode; the
        # constant index_map still only DMAs the weights once per kernel call.
        y_p, h_p = _call(None)

    if aligned:
        return y_p, h_p
    return y_p[:, :in_dim], h_p[:, :hid]


def _reference(x, w1, b1):
    h = jax.nn.sigmoid(x @ w1.T + b1[None, :])
    y = jax.nn.sigmoid(h @ w1)
    return y, h


def _check_case(B, InputDim, HiddenNum):
    key = jax.random.PRNGKey(0)
    kx, kw, kb = jax.random.split(key, 3)
    x = jax.random.normal(kx, (B, InputDim), dtype=jnp.float32)
    w1 = jax.random.normal(kw, (HiddenNum, InputDim), dtype=jnp.float32) * 0.1
    b1 = jax.random.normal(kb, (HiddenNum,), dtype=jnp.float32) * 0.1

    y, x1 = net_forward(x, w1, b1)
    jax.block_until_ready((y, x1))

    y_ref, x1_ref = _reference(x, w1, b1)
    assert y.shape == (B, InputDim) and x1.shape == (B, HiddenNum)
    # bf16 MXU operands + bf16 outputs vs. f32 reference => mixed-precision tolerance.
    y32, x132 = y.astype(jnp.float32), x1.astype(jnp.float32)
    assert jnp.allclose(y32, y_ref, atol=2e-2, rtol=2e-2), float(jnp.abs(y32 - y_ref).max())
    assert jnp.allclose(x132, x1_ref, atol=2e-2, rtol=2e-2), float(jnp.abs(x132 - x1_ref).max())


if __name__ == "__main__":
    # Small shapes consistent with the module (OutputDim is forced to InputDim by
    # the tied weights).
    # 1) Unaligned feature dims -> exercises the zero-pad path (single batch tile).
    _check_case(B=8, InputDim=16, HiddenNum=32)
    # 2) 128-aligned feature dims with a batch remainder -> exercises the no-pad
    #    fast path and the cdiv-masked edge tile (2 batch tiles).
    _check_case(B=20, InputDim=128, HiddenNum=128)
    print("KERNEL_OK")
</pallas_src>

<mosaic_0001>
module attributes {stable_mosaic.version = 11 : i64} {
  func.func @_net_kernel(%arg0: i32, %arg1: memref<8x128xbf16, #tpu.memory_space<vmem>>, %arg2: memref<128x128xbf16, #tpu.memory_space<vmem>>, %arg3: memref<128x128xbf16, #tpu.memory_space<vmem>>, %arg4: memref<1x128xf32, #tpu.memory_space<vmem>>, %arg5: memref<8x128xbf16, #tpu.memory_space<vmem>>, %arg6: memref<8x128xbf16, #tpu.memory_space<vmem>>) attributes {dimension_semantics = [#tpu.dimension_semantics<parallel>], iteration_bounds = array<i64: 1>, scalar_prefetch = 0 : i64, scratch_operands = 0 : i64, tpu.core_type = #tpu.core_type<tc>, window_params = [{transform_indices = @transform_0, window_bounds = array<i64: 8, 128>}, {pipeline_mode = #tpu.pipeline_mode<synchronous>, transform_indices = @transform_1, window_bounds = array<i64: 128, 128>}, {pipeline_mode = #tpu.pipeline_mode<synchronous>, transform_indices = @transform_2, window_bounds = array<i64: 128, 128>}, {pipeline_mode = #tpu.pipeline_mode<synchronous>, transform_indices = @transform_3, window_bounds = array<i64: 1, 128>}, {transform_indices = @transform_4, window_bounds = array<i64: 8, 128>}, {transform_indices = @transform_5, window_bounds = array<i64: 8, 128>}]} {
    %c0 = arith.constant 0 : index
    %c0_0 = arith.constant 0 : index
    %0 = vector.load %arg1[%c0, %c0_0] : memref<8x128xbf16, #tpu.memory_space<vmem>>, vector<8x128xbf16>
    %c0_1 = arith.constant 0 : index
    %c0_2 = arith.constant 0 : index
    %1 = vector.load %arg2[%c0_1, %c0_2] : memref<128x128xbf16, #tpu.memory_space<vmem>>, vector<128x128xbf16>
    %cst = arith.constant dense<0.000000e+00> : vector<8x128xf32>
    %2 = tpu.matmul %0, %1, %cst {dimension_numbers = #tpu.dot_dimension_numbers<[1], [0], [0], [1], [0, 0, 1, 1], [], []>} : vector<8x128xbf16>, vector<128x128xbf16>, vector<8x128xf32> -> vector<8x128xf32>
    %c0_3 = arith.constant 0 : index
    %c0_4 = arith.constant 0 : index
    %3 = vector.load %arg4[%c0_3, %c0_4] : memref<1x128xf32, #tpu.memory_space<vmem>>, vector<1x128xf32>
    %4 = vector.broadcast %3 : vector<1x128xf32> to vector<8x128xf32>
    %5 = arith.addf %2, %4 : vector<8x128xf32>
    %cst_5 = arith.constant 5.000000e-01 : f32
    %6 = vector.broadcast %cst_5 : f32 to vector<8x128xf32>
    %7 = arith.mulf %6, %5 : vector<8x128xf32>
    %8 = math.tanh %7 : vector<8x128xf32>
    %cst_6 = arith.constant 5.000000e-01 : f32
    %9 = vector.broadcast %cst_6 : f32 to vector<8x128xf32>
    %10 = arith.mulf %9, %8 : vector<8x128xf32>
    %cst_7 = arith.constant 5.000000e-01 : f32
    %11 = vector.broadcast %cst_7 : f32 to vector<8x128xf32>
    %12 = arith.addf %10, %11 : vector<8x128xf32>
    %13 = arith.truncf %12 : vector<8x128xf32> to vector<8x128xbf16>
    %c0_8 = arith.constant 0 : index
    %c0_9 = arith.constant 0 : index
    %14 = vector.load %arg6[%c0_8, %c0_9] : memref<8x128xbf16, #tpu.memory_space<vmem>>, vector<8x128xbf16>
    tpu.vector_store %arg6[%c0_8, %c0_9], %13 {strides = array<i32>} : memref<8x128xbf16, #tpu.memory_space<vmem>>, vector<8x128xbf16>,
    %15 = arith.truncf %12 : vector<8x128xf32> to vector<8x128xbf16>
    %c0_10 = arith.constant 0 : index
    %c0_11 = arith.constant 0 : index
    %16 = vector.load %arg3[%c0_10, %c0_11] : memref<128x128xbf16, #tpu.memory_space<vmem>>, vector<128x128xbf16>
    %cst_12 = arith.constant dense<0.000000e+00> : vector<8x128xf32>
    %17 = tpu.matmul %15, %16, %cst_12 {dimension_numbers = #tpu.dot_dimension_numbers<[1], [0], [0], [1], [0, 0, 1, 1], [], []>} : vector<8x128xbf16>, vector<128x128xbf16>, vector<8x128xf32> -> vector<8x128xf32>
    %cst_13 = arith.constant 5.000000e-01 : f32
    %18 = vector.broadcast %cst_13 : f32 to vector<8x128xf32>
    %19 = arith.mulf %18, %17 : vector<8x128xf32>
    %20 = math.tanh %19 : vector<8x128xf32>
    %cst_14 = arith.constant 5.000000e-01 : f32
    %21 = vector.broadcast %cst_14 : f32 to vector<8x128xf32>
    %22 = arith.mulf %21, %20 : vector<8x128xf32>
    %cst_15 = arith.constant 5.000000e-01 : f32
    %23 = vector.broadcast %cst_15 : f32 to vector<8x128xf32>
    %24 = arith.addf %22, %23 : vector<8x128xf32>
    %25 = arith.truncf %24 : vector<8x128xf32> to vector<8x128xbf16>
    %c0_16 = arith.constant 0 : index
    %c0_17 = arith.constant 0 : index
    %26 = vector.load %arg5[%c0_16, %c0_17] : memref<8x128xbf16, #tpu.memory_space<vmem>>, vector<8x128xbf16>
    tpu.vector_store %arg5[%c0_16, %c0_17], %25 {strides = array<i32>} : memref<8x128xbf16, #tpu.memory_space<vmem>>, vector<8x128xbf16>,
    return
  }
  func.func @transform_0(%arg0: i32) -> (i32, i32) {
    %c0_i32 = arith.constant 0 : i32
    %c0_i32_0 = arith.constant 0 : i32
    return %arg0, %c0_i32 : i32, i32
  }
  func.func @transform_1(%arg0: i32) -> (i32, i32) {
    %c0_i32 = arith.constant 0 : i32
    %c0_i32_0 = arith.constant 0 : i32
    %c0_i32_1 = arith.constant 0 : i32
    return %c0_i32, %c0_i32_0 : i32, i32
  }
  func.func @transform_2(%arg0: i32) -> (i32, i32) {
    %c0_i32 = arith.constant 0 : i32
    %c0_i32_0 = arith.constant 0 : i32
    %c0_i32_1 = arith.constant 0 : i32
    return %c0_i32, %c0_i32_0 : i32, i32
  }
  func.func @transform_3(%arg0: i32) -> (i32, i32) {
    %c0_i32 = arith.constant 0 : i32
    %c0_i32_0 = arith.constant 0 : i32
    %c0_i32_1 = arith.constant 0 : i32
    return %c0_i32, %c0_i32_0 : i32, i32
  }
  func.func @transform_4(%arg0: i32) -> (i32, i32) {
    %c0_i32 = arith.constant 0 : i32
    %c0_i32_0 = arith.constant 0 : i32
    return %arg0, %c0_i32 : i32, i32
  }
  func.func @transform_5(%arg0: i32) -> (i32, i32) {
    %c0_i32 = arith.constant 0 : i32
    %c0_i32_0 = arith.constant 0 : i32
    return %arg0, %c0_i32 : i32, i32
  }
}

module attributes {stable_mosaic.version = 11 : i64} {
  func.func @_net_kernel(%arg0: i32, %arg1: memref<8x128xbf16, #tpu.memory_space<vmem>>, %arg2: memref<128x128xbf16, #tpu.memory_space<vmem>>, %arg3: memref<128x128xbf16, #tpu.memory_space<vmem>>, %arg4: memref<1x128xf32, #tpu.memory_space<vmem>>, %arg5: memref<8x128xbf16, #tpu.memory_space<vmem>>, %arg6: memref<8x128xbf16, #tpu.memory_space<vmem>>) attributes {dimension_semantics = [#tpu.dimension_semantics<parallel>], iteration_bounds = array<i64: 1>, scalar_prefetch = 0 : i64, scratch_operands = 0 : i64, tpu.core_type = #tpu.core_type<tc>, window_params = [{transform_indices = @transform_0, window_bounds = array<i64: 8, 128>}, {pipeline_mode = #tpu.pipeline_mode<synchronous>, transform_indices = @transform_1, window_bounds = array<i64: 128, 128>}, {pipeline_mode = #tpu.pipeline_mode<synchronous>, transform_indices = @transform_2, window_bounds = array<i64: 128, 128>}, {pipeline_mode = #tpu.pipeline_mode<synchronous>, transform_indices = @transform_3, window_bounds = array<i64: 1, 128>}, {transform_indices = @transform_4, window_bounds = array<i64: 8, 128>}, {transform_indices = @transform_5, window_bounds = array<i64: 8, 128>}]} {
    %c0 = arith.constant 0 : index
    %c0_0 = arith.constant 0 : index
    %0 = vector.load %arg1[%c0, %c0_0] : memref<8x128xbf16, #tpu.memory_space<vmem>>, vector<8x128xbf16>
    %c0_1 = arith.constant 0 : index
    %c0_2 = arith.constant 0 : index
    %1 = vector.load %arg2[%c0_1, %c0_2] : memref<128x128xbf16, #tpu.memory_space<vmem>>, vector<128x128xbf16>
    %cst = arith.constant dense<0.000000e+00> : vector<8x128xf32>
    %2 = tpu.matmul %0, %1, %cst {dimension_numbers = #tpu.dot_dimension_numbers<[1], [0], [0], [1], [0, 0, 1, 1], [], []>} : vector<8x128xbf16>, vector<128x128xbf16>, vector<8x128xf32> -> vector<8x128xf32>
    %c0_3 = arith.constant 0 : index
    %c0_4 = arith.constant 0 : index
    %3 = vector.load %arg4[%c0_3, %c0_4] : memref<1x128xf32, #tpu.memory_space<vmem>>, vector<1x128xf32>
    %4 = vector.broadcast %3 : vector<1x128xf32> to vector<8x128xf32>
    %5 = arith.addf %2, %4 : vector<8x128xf32>
    %cst_5 = arith.constant 5.000000e-01 : f32
    %6 = vector.broadcast %cst_5 : f32 to vector<8x128xf32>
    %7 = arith.mulf %6, %5 : vector<8x128xf32>
    %8 = math.tanh %7 : vector<8x128xf32>
    %cst_6 = arith.constant 5.000000e-01 : f32
    %9 = vector.broadcast %cst_6 : f32 to vector<8x128xf32>
    %10 = arith.mulf %9, %8 : vector<8x128xf32>
    %cst_7 = arith.constant 5.000000e-01 : f32
    %11 = vector.broadcast %cst_7 : f32 to vector<8x128xf32>
    %12 = arith.addf %10, %11 : vector<8x128xf32>
    %13 = arith.truncf %12 : vector<8x128xf32> to vector<8x128xbf16>
    %c0_8 = arith.constant 0 : index
    %c0_9 = arith.constant 0 : index
    %14 = vector.load %arg6[%c0_8, %c0_9] : memref<8x128xbf16, #tpu.memory_space<vmem>>, vector<8x128xbf16>
    tpu.vector_store %arg6[%c0_8, %c0_9], %13 {strides = array<i32>} : memref<8x128xbf16, #tpu.memory_space<vmem>>, vector<8x128xbf16>,
    %15 = arith.truncf %12 : vector<8x128xf32> to vector<8x128xbf16>
    %c0_10 = arith.constant 0 : index
    %c0_11 = arith.constant 0 : index
    %16 = vector.load %arg3[%c0_10, %c0_11] : memref<128x128xbf16, #tpu.memory_space<vmem>>, vector<128x128xbf16>
    %cst_12 = arith.constant dense<0.000000e+00> : vector<8x128xf32>
    %17 = tpu.matmul %15, %16, %cst_12 {dimension_numbers = #tpu.dot_dimension_numbers<[1], [0], [0], [1], [0, 0, 1, 1], [], []>} : vector<8x128xbf16>, vector<128x128xbf16>, vector<8x128xf32> -> vector<8x128xf32>
    %cst_13 = arith.constant 5.000000e-01 : f32
    %18 = vector.broadcast %cst_13 : f32 to vector<8x128xf32>
    %19 = arith.mulf %18, %17 : vector<8x128xf32>
    %20 = math.tanh %19 : vector<8x128xf32>
    %cst_14 = arith.constant 5.000000e-01 : f32
    %21 = vector.broadcast %cst_14 : f32 to vector<8x128xf32>
    %22 = arith.mulf %21, %20 : vector<8x128xf32>
    %cst_15 = arith.constant 5.000000e-01 : f32
    %23 = vector.broadcast %cst_15 : f32 to vector<8x128xf32>
    %24 = arith.addf %22, %23 : vector<8x128xf32>
    %25 = arith.truncf %24 : vector<8x128xf32> to vector<8x128xbf16>
    %c0_16 = arith.constant 0 : index
    %c0_17 = arith.constant 0 : index
    %26 = vector.load %arg5[%c0_16, %c0_17] : memref<8x128xbf16, #tpu.memory_space<vmem>>, vector<8x128xbf16>
    tpu.vector_store %arg5[%c0_16, %c0_17], %25 {strides = array<i32>} : memref<8x128xbf16, #tpu.memory_space<vmem>>, vector<8x128xbf16>,
    return
  }
  func.func @transform_0(%arg0: i32) -> (i32, i32) {
    %c0_i32 = arith.constant 0 : i32
    %c0_i32_0 = arith.constant 0 : i32
    return %arg0, %c0_i32 : i32, i32
  }
  func.func @transform_1(%arg0: i32) -> (i32, i32) {
    %c0_i32 = arith.constant 0 : i32
    %c0_i32_0 = arith.constant 0 : i32
    %c0_i32_1 = arith.constant 0 : i32
    return %c0_i32, %c0_i32_0 : i32, i32
  }
  func.func @transform_2(%arg0: i32) -> (i32, i32) {
    %c0_i32 = arith.constant 0 : i32
    %c0_i32_0 = arith.constant 0 : i32
    %c0_i32_1 = arith.constant 0 : i32
    return %c0_i32, %c0_i32_0 : i32, i32
  }
  func.func @transform_3(%arg0: i32) -> (i32, i32) {
    %c0_i32 = arith.constant 0 : i32
    %c0_i32_0 = arith.constant 0 : i32
    %c0_i32_1 = arith.constant 0 : i32
    return %c0_i32, %c0_i32_0 : i32, i32
  }
  func.func @transform_4(%arg0: i32) -> (i32, i32) {
    %c0_i32 = arith.constant 0 : i32
    %c0_i32_0 = arith.constant 0 : i32
    return %arg0, %c0_i32 : i32, i32
  }
  func.func @transform_5(%arg0: i32) -> (i32, i32) {
    %c0_i32 = arith.constant 0 : i32
    %c0_i32_0 = arith.constant 0 : i32
    return %arg0, %c0_i32 : i32, i32
  }
}

</mosaic_0001>

<llo_original>
// kernel: tpu_custom_call.1
$region0: #{tpu_custom_call.1}
  #allocation0 [shape = 'u32[]', space=smem, size = 0x4, offset = 0x4, fixed_abs, tag = 'smem constant byte address 0x4 - core index']
  #allocation1 [shape = 'u32[144,128]{1,0:T(1,128)}', space=vmem, size = 0x12000, scoped, tag = 'internal scratch']
  %s0 = inlined_call_operand.hbm [shape: bf16[8,128], index: 0, kind: input, shape index: {}]
  %s1 = inlined_call_operand.hbm [shape: bf16[128,128], index: 1, kind: input, shape index: {}]
  %s2 = inlined_call_operand.hbm [shape: bf16[128,128], index: 2, kind: input, shape index: {}]
  %s3 = inlined_call_operand.vmem [shape: f32[1,128], index: 3, kind: input, shape index: {}]
  %s4 = inlined_call_operand.hbm [shape: bf16[8,128], index: 4, kind: output, shape index: {0}]
  %s5 = inlined_call_operand.hbm [shape: bf16[8,128], index: 5, kind: output, shape index: {1}]
  %6 = xla_tuple %s4, %s5
  %s7 = sld [smem:[#allocation0]]
  $region46: #{tpu_custom_call.1} parent=0
    _
  %s9 = ssub.s32 1, %s7
  %s10 = scalar_select 0, %s9, %s7
  $region1: #{tpu_custom_call.1} parent=0
    #allocation2 [shape = 'u8[2048]{0}', space=vmem, size = 0x800, scoped, tag = 'input window, operand 0, single buffered']
    #allocation3 [shape = 's32[1]{0}', space=sflag, size = 0x4, scoped, tag = 'scoped memory for tpu_custom_call.1']
    #allocation4 [shape = 's32[1]{0}', space=sflag, size = 0x4, scoped, tag = 'scoped memory for tpu_custom_call.1']
    #allocation5 [shape = 'u8[32768]{0}', space=vmem, size = 0x8000, scoped, tag = 'input window, operand 1, single buffered']
    #allocation6 [shape = 's32[1]{0}', space=sflag, size = 0x4, scoped, tag = 'scoped memory for tpu_custom_call.1']
    #allocation7 [shape = 'u8[32768]{0}', space=vmem, size = 0x8000, scoped, tag = 'input window, operand 2, single buffered']
    #allocation8 [shape = 'u8[2048]{0}', space=vmem, size = 0x800, scoped, tag = 'output window, operand 0, single buffered']
    #allocation9 [shape = 'u8[2048]{0}', space=vmem, size = 0x800, scoped, tag = 'output window, operand 1, single buffered']
    #allocation10 [shape = 's32[1]{0}', space=sflag, size = 0x4, scoped, tag = 'scoped memory for tpu_custom_call.1']
    %11 = vsyncpa [#allocation3], 0
    %12 = vsyncpa [#allocation6], 0
    %13 = vsyncpa [#allocation4], 0
    %14 = vsyncpa [#allocation10], 0
    // Predicated region
    $region2: #{tpu_custom_call.1} parent=1 // pred_check
      _
    $region3: #{tpu_custom_call.1} parent=1 // pred_check_branch
      %16 = sbr.rel (0) target = $region5
    $region4: #{tpu_custom_call.1} parent=1 // pred_region
      %s18 = ssub.s32 64, 64
      %19 = vsyncadd [#allocation3], %s18
      %s21 = sshll.u32 [#allocation2], 4
      %s22 = int_to_ptr.vmem [resolvable:$true] %s21
      %24 = dma.hbm_to_vmem [thread:$0]  %s0, 64, %s22, [#allocation3]
    $region5: #{tpu_custom_call.1} parent=1 // pred_fallthru
      _
    // Predicated region
    $region6: #{tpu_custom_call.1} parent=1 // pred_check
      _
    $region7: #{tpu_custom_call.1} parent=1 // pred_check_branch
      %26 = sbr.rel (0) target = $region9
    $region8: #{tpu_custom_call.1} parent=1 // pred_region
      %s28 = ssub.s32 1024, 1024
      %29 = vsyncadd [#allocation6], %s28
      %s30 = sshll.u32 [#allocation5], 4
      %s31 = int_to_ptr.vmem [resolvable:$true] %s30
      %36 = dma.hbm_to_vmem [thread:$0]  %s1, 1024, %s31, [#allocation6], 64, 64, 4
    $region9: #{tpu_custom_call.1} parent=1 // pred_fallthru
      _
    // Predicated region
    $region10: #{tpu_custom_call.1} parent=1 // pred_check
      _
    $region11: #{tpu_custom_call.1} parent=1 // pred_check_branch
      %38 = sbr.rel (0) target = $region13
    $region12: #{tpu_custom_call.1} parent=1 // pred_region
      %s40 = ssub.s32 1024, 1024
      %41 = vsyncadd [#allocation6], %s40
      %s42 = sshll.u32 [#allocation7], 4
      %s43 = int_to_ptr.vmem [resolvable:$true] %s42
      %48 = dma.hbm_to_vmem [thread:$0]  %s2, 1024, %s43, [#allocation6], 64, 64, 4
    $region13: #{tpu_custom_call.1} parent=1 // pred_fallthru
      _
    // Predicated region
    $region14: #{tpu_custom_call.1} parent=1 // pred_check
      _
    $region15: #{tpu_custom_call.1} parent=1 // pred_check_branch
      %50 = sbr.rel (0) target = $region17
    $region16: #{tpu_custom_call.1} parent=1 // pred_region
      _
    $region17: #{tpu_custom_call.1} parent=1 // pred_fallthru
      _
    // Predicated region
    $region18: #{tpu_custom_call.1} parent=1 // pred_check
      _
    $region19: #{tpu_custom_call.1} parent=1 // pred_check_branch
      %52 = sbr.rel (0) target = $region21
    $region20: #{tpu_custom_call.1} parent=1 // pred_region
      %53 = dma.done [#allocation3], 64
    $region21: #{tpu_custom_call.1} parent=1 // pred_fallthru
      _
    // Predicated region
    $region22: #{tpu_custom_call.1} parent=1 // pred_check
      _
    $region23: #{tpu_custom_call.1} parent=1 // pred_check_branch
      %55 = sbr.rel (0) target = $region25
    $region24: #{tpu_custom_call.1} parent=1 // pred_region
      %56 = dma.done [#allocation6], 1024
    $region25: #{tpu_custom_call.1} parent=1 // pred_fallthru
      _
    // Predicated region
    $region26: #{tpu_custom_call.1} parent=1 // pred_check
      _
    $region27: #{tpu_custom_call.1} parent=1 // pred_check_branch
      %58 = sbr.rel (0) target = $region29
    $region28: #{tpu_custom_call.1} parent=1 // pred_region
      %59 = dma.done [#allocation6], 1024
    $region29: #{tpu_custom_call.1} parent=1 // pred_fallthru
      _
    %v61 = vld [vmem:[#allocation2] sm:$0xf]
    %v62 = vld [vmem:[#allocation5] sm:$0xf]
    %v63 = vld [vmem:[#allocation5 + $0x4] sm:$0xf]
    %v64 = vld [vmem:[#allocation5 + $0x8] sm:$0xf]
    %v65 = vld [vmem:[#allocation5 + $0xc] sm:$0xf]
    %v66 = vld [vmem:[#allocation5 + $0x10] sm:$0xf]
    %v67 = vld [vmem:[#allocation5 + $0x14] sm:$0xf]
    %v68 = vld [vmem:[#allocation5 + $0x18] sm:$0xf]
    %v69 = vld [vmem:[#allocation5 + $0x1c] sm:$0xf]
    %v70 = vld [vmem:[#allocation5 + $0x20] sm:$0xf]
    %v71 = vld [vmem:[#allocation5 + $0x24] sm:$0xf]
    %v72 = vld [vmem:[#allocation5 + $0x28] sm:$0xf]
    %v73 = vld [vmem:[#allocation5 + $0x2c] sm:$0xf]
    %v74 = vld [vmem:[#allocation5 + $0x30] sm:$0xf]
    %v75 = vld [vmem:[#allocation5 + $0x34] sm:$0xf]
    %v76 = vld [vmem:[#allocation5 + $0x38] sm:$0xf]
    %v77 = vld [vmem:[#allocation5 + $0x3c] sm:$0xf]
    %v78 = vld [vmem:[%s3] sm:$0x1]
    %v80 = vlaneseq
    %v81 = vshrl.u32 %v80, 7
    %v82 = vsub.s32 0, %v81
    %v83 = vrot.slane %v78, %v82
    %v101 = vunpack.c.l.b16 %v62
    %v102 = vunpack.c.l.b16 %v63
    %v103 = vunpack.c.l.b16 %v64
    %v104 = vunpack.c.l.b16 %v65
    %v105 = vunpack.c.l.b16 %v66
    %v106 = vunpack.c.l.b16 %v67
    %v107 = vunpack.c.l.b16 %v68
    %v108 = vunpack.c.l.b16 %v69
    %v109 = vunpack.c.l.b16 %v70
    %v110 = vunpack.c.l.b16 %v71
    %v111 = vunpack.c.l.b16 %v72
    %v112 = vunpack.c.l.b16 %v73
    %v113 = vunpack.c.l.b16 %v74
    %v114 = vunpack.c.l.b16 %v75
    %v115 = vunpack.c.l.b16 %v76
    %v116 = vunpack.c.l.b16 %v77
    %v117 = vpack.c.b16 %v102, %v101
    %v118 = vpack.c.b16 %v104, %v103
    %v119 = vpack.c.b16 %v106, %v105
    %v120 = vpack.c.b16 %v108, %v107
    %v121 = vpack.c.b16 %v110, %v109
    %v122 = vpack.c.b16 %v112, %v111
    %v123 = vpack.c.b16 %v114, %v113
    %v124 = vpack.c.b16 %v116, %v115
    %133 = vmatprep.subr.bf16.mxu0 0
    %134 = vmatpush1.bf16.msra.mxu0 %v124
    %135 = vmatprep.subr.bf16.mxu0 0
    %136 = vmatpush1.bf16.msra.mxu0 %v123
    %137 = vmatprep.subr.bf16.mxu0 0
    %138 = vmatpush1.bf16.msra.mxu0 %v122
    %139 = vmatprep.subr.bf16.mxu0 0
    %140 = vmatpush1.bf16.msra.mxu0 %v121
    %141 = vmatprep.subr.bf16.mxu0 0
    %142 = vmatpush1.bf16.msra.mxu0 %v120
    %143 = vmatprep.subr.bf16.mxu0 0
    %144 = vmatpush1.bf16.msra.mxu0 %v119
    %145 = vmatprep.subr.bf16.mxu0 0
    %146 = vmatpush1.bf16.msra.mxu0 %v118
    %147 = vmatprep.subr.bf16.mxu0 0
    %148 = vmatpush1.bf16.msra.mxu0 %v117
    %149 = vmatprep.subr.bf16.mxu0 0
    %150 = vmatpush2.bf16.msra.mxu0 0
    %151 = vmatprep.subr.bf16.mxu0 0
    %152 = vmatpush2.bf16.msra.mxu0 0
    %153 = vmatprep.subr.bf16.mxu0 0
    %154 = vmatpush2.bf16.msra.mxu0 0
    %155 = vmatprep.subr.bf16.mxu0 0
    %156 = vmatpush2.bf16.msra.mxu0 0
    %157 = vmatprep.subr.bf16.mxu0 0
    %158 = vmatpush2.bf16.msra.mxu0 0
    %159 = vmatprep.subr.bf16.mxu0 0
    %160 = vmatpush2.bf16.msra.mxu0 0
    %161 = vmatprep.subr.bf16.mxu0 0
    %162 = vmatpush2.bf16.msra.mxu0 0
    %163 = vmatprep.subr.bf16.mxu0 0
    %164 = vmatpush2.bf16.msra.mxu0 0
    %165 = vmatprep.mubr.bf16.mxu0 0
    %166 = vmatmul.mubr.bf16.gmra.mxu0 %v61
    %v167 = vpop.f32.mrf.mxu0
    %v168 = vadd.f32 %v83, %v167
    %v169 = vpop.f32.mrf.mxu0
    %v170 = vpop.f32.mrf.mxu0
    %v171 = vpop.f32.mrf.mxu0
    %172 = vdwg.mxu0
    %v173 = vmul.f32 %v168, 0.5
    %v174 = vtanh.pop %v173
    %v175 = vmul.f32 %v174, 0.5
    %v176 = vadd.f32 %v175, 0.5
    %v177 = vpack.c.bf16 %v176, %v176
    %178 = vst [vmem:[#allocation9] sm:$0xf] %v177
    %v179 = vld [vmem:[#allocation7] sm:$0xf]
    %v180 = vld [vmem:[#allocation7 + $0x4] sm:$0xf]
    %v181 = vld [vmem:[#allocation7 + $0x8] sm:$0xf]
    %v182 = vld [vmem:[#allocation7 + $0xc] sm:$0xf]
    %v183 = vld [vmem:[#allocation7 + $0x10] sm:$0xf]
    %v184 = vld [vmem:[#allocation7 + $0x14] sm:$0xf]
    %v185 = vld [vmem:[#allocation7 + $0x18] sm:$0xf]
    %v186 = vld [vmem:[#allocation7 + $0x1c] sm:$0xf]
    %v187 = vld [vmem:[#allocation7 + $0x20] sm:$0xf]
    %v188 = vld [vmem:[#allocation7 + $0x24] sm:$0xf]
    %v189 = vld [vmem:[#allocation7 + $0x28] sm:$0xf]
    %v190 = vld [vmem:[#allocation7 + $0x2c] sm:$0xf]
    %v191 = vld [vmem:[#allocation7 + $0x30] sm:$0xf]
    %v192 = vld [vmem:[#allocation7 + $0x34] sm:$0xf]
    %v193 = vld [vmem:[#allocation7 + $0x38] sm:$0xf]
    %v194 = vld [vmem:[#allocation7 + $0x3c] sm:$0xf]
    %v211 = vunpack.c.l.b16 %v179
    %v212 = vunpack.c.l.b16 %v180
    %v213 = vunpack.c.l.b16 %v181
    %v214 = vunpack.c.l.b16 %v182
    %v215 = vunpack.c.l.b16 %v183
    %v216 = vunpack.c.l.b16 %v184
    %v217 = vunpack.c.l.b16 %v185
    %v218 = vunpack.c.l.b16 %v186
    %v219 = vunpack.c.l.b16 %v187
    %v220 = vunpack.c.l.b16 %v188
    %v221 = vunpack.c.l.b16 %v189
    %v222 = vunpack.c.l.b16 %v190
    %v223 = vunpack.c.l.b16 %v191
    %v224 = vunpack.c.l.b16 %v192
    %v225 = vunpack.c.l.b16 %v193
    %v226 = vunpack.c.l.b16 %v194
    %v227 = vpack.c.b16 %v212, %v211
    %v228 = vpack.c.b16 %v214, %v213
    %v229 = vpack.c.b16 %v216, %v215
    %v230 = vpack.c.b16 %v218, %v217
    %v231 = vpack.c.b16 %v220, %v219
    %v232 = vpack.c.b16 %v222, %v221
    %v233 = vpack.c.b16 %v224, %v223
    %v234 = vpack.c.b16 %v226, %v225
    %243 = vmatprep.subr.bf16.mxu0 0
    %244 = vmatpush1.bf16.msra.mxu0 %v234
    %245 = vmatprep.subr.bf16.mxu0 0
    %246 = vmatpush1.bf16.msra.mxu0 %v233
    %247 = vmatprep.subr.bf16.mxu0 0
    %248 = vmatpush1.bf16.msra.mxu0 %v232
    %249 = vmatprep.subr.bf16.mxu0 0
    %250 = vmatpush1.bf16.msra.mxu0 %v231
    %251 = vmatprep.subr.bf16.mxu0 0
    %252 = vmatpush1.bf16.msra.mxu0 %v230
    %253 = vmatprep.subr.bf16.mxu0 0
    %254 = vmatpush1.bf16.msra.mxu0 %v229
    %255 = vmatprep.subr.bf16.mxu0 0
    %256 = vmatpush1.bf16.msra.mxu0 %v228
    %257 = vmatprep.subr.bf16.mxu0 0
    %258 = vmatpush1.bf16.msra.mxu0 %v227
    %259 = vmatprep.subr.bf16.mxu0 0
    %260 = vmatpush2.bf16.msra.mxu0 0
    %261 = vmatprep.subr.bf16.mxu0 0
    %262 = vmatpush2.bf16.msra.mxu0 0
    %263 = vmatprep.subr.bf16.mxu0 0
    %264 = vmatpush2.bf16.msra.mxu0 0
    %265 = vmatprep.subr.bf16.mxu0 0
    %266 = vmatpush2.bf16.msra.mxu0 0
    %267 = vmatprep.subr.bf16.mxu0 0
    %268 = vmatpush2.bf16.msra.mxu0 0
    %269 = vmatprep.subr.bf16.mxu0 0
    %270 = vmatpush2.bf16.msra.mxu0 0
    %271 = vmatprep.subr.bf16.mxu0 0
    %272 = vmatpush2.bf16.msra.mxu0 0
    %273 = vmatprep.subr.bf16.mxu0 0
    %274 = vmatpush2.bf16.msra.mxu0 0
    %275 = vmatprep.mubr.bf16.mxu0 0
    %276 = vmatmul.mubr.bf16.gmra.mxu0 %v177
    %v277 = vpop.f32.mrf.mxu0
    %v278 = vadd.f32 0.0, %v277
    %v279 = vpop.f32.mrf.mxu0
    %v280 = vpop.f32.mrf.mxu0
    %v281 = vpop.f32.mrf.mxu0
    %282 = vdwg.mxu0
    %v283 = vmul.f32 %v278, 0.5
    %v284 = vtanh.pop %v283
    %v285 = vmul.f32 %v284, 0.5
    %v286 = vadd.f32 %v285, 0.5
    %v287 = vpack.c.bf16 %v286, %v286
    %288 = vst [vmem:[#allocation8] sm:$0xf] %v287
    // Predicated region
    $region30: #{tpu_custom_call.1} parent=1 // pred_check
      _
    $region31: #{tpu_custom_call.1} parent=1 // pred_check_branch
      %290 = sbr.rel (0) target = $region33
    $region32: #{tpu_custom_call.1} parent=1 // pred_region
      %s292 = ssub.s32 64, 64
      %293 = vsyncadd [#allocation4], %s292
      %s295 = sshll.u32 [#allocation8], 4
      %s296 = int_to_ptr.vmem [resolvable:$true] %s295
      %298 = dma.vmem_to_hbm [thread:$0]  %s296, 64, %s4, [#allocation4]
    $region33: #{tpu_custom_call.1} parent=1 // pred_fallthru
      _
    // Predicated region
    $region34: #{tpu_custom_call.1} parent=1 // pred_check
      _
    $region35: #{tpu_custom_call.1} parent=1 // pred_check_branch
      %300 = sbr.rel (0) target = $region37
    $region36: #{tpu_custom_call.1} parent=1 // pred_region
      %s302 = ssub.s32 64, 64
      %303 = vsyncadd [#allocation10], %s302
      %s305 = sshll.u32 [#allocation9], 4
      %s306 = int_to_ptr.vmem [resolvable:$true] %s305
      %308 = dma.vmem_to_hbm [thread:$0]  %s306, 64, %s5, [#allocation10]
    $region37: #{tpu_custom_call.1} parent=1 // pred_fallthru
      _
    // Predicated region
    $region38: #{tpu_custom_call.1} parent=1 // pred_check
      _
    $region39: #{tpu_custom_call.1} parent=1 // pred_check_branch
      %310 = sbr.rel (0) target = $region41
    $region40: #{tpu_custom_call.1} parent=1 // pred_region
      %311 = dma.done [#allocation4], 64
    $region41: #{tpu_custom_call.1} parent=1 // pred_fallthru
      _
    // Predicated region
    $region42: #{tpu_custom_call.1} parent=1 // pred_check
      _
    $region43: #{tpu_custom_call.1} parent=1 // pred_check_branch
      %313 = sbr.rel (0) target = $region45
    $region44: #{tpu_custom_call.1} parent=1 // pred_region
      %314 = dma.done [#allocation10], 64
    $region45: #{tpu_custom_call.1} parent=1 // pred_fallthru
      _
    %315 = vsyncpa [#allocation3], 1
    %316 = vsyncpa [#allocation6], 1
    %317 = vsyncpa [#allocation4], 1
    %318 = vsyncpa [#allocation10], 1

// kernel: tpu_custom_call.1
$region0: #{tpu_custom_call.1}
  #allocation0 [shape = 'u32[]', space=smem, size = 0x4, offset = 0x4, fixed_abs, tag = 'smem constant byte address 0x4 - core index']
  #allocation1 [shape = 'u32[144,128]{1,0:T(1,128)}', space=vmem, size = 0x12000, scoped, tag = 'internal scratch']
  %s0 = inlined_call_operand.hbm [shape: bf16[8,128], index: 0, kind: input, shape index: {}]
  %s1 = inlined_call_operand.hbm [shape: bf16[128,128], index: 1, kind: input, shape index: {}]
  %s2 = inlined_call_operand.hbm [shape: bf16[128,128], index: 2, kind: input, shape index: {}]
  %s3 = inlined_call_operand.vmem [shape: f32[1,128], index: 3, kind: input, shape index: {}]
  %s4 = inlined_call_operand.hbm [shape: bf16[8,128], index: 4, kind: output, shape index: {0}]
  %s5 = inlined_call_operand.hbm [shape: bf16[8,128], index: 5, kind: output, shape index: {1}]
  %6 = xla_tuple %s4, %s5
  %s7 = sld [smem:[#allocation0]]
  $region46: #{tpu_custom_call.1} parent=0
    _
  %s9 = ssub.s32 1, %s7
  %s10 = scalar_select 0, %s9, %s7
  $region1: #{tpu_custom_call.1} parent=0
    #allocation2 [shape = 'u8[2048]{0}', space=vmem, size = 0x800, scoped, tag = 'input window, operand 0, single buffered']
    #allocation3 [shape = 's32[1]{0}', space=sflag, size = 0x4, scoped, tag = 'scoped memory for tpu_custom_call.1']
    #allocation4 [shape = 's32[1]{0}', space=sflag, size = 0x4, scoped, tag = 'scoped memory for tpu_custom_call.1']
    #allocation5 [shape = 'u8[32768]{0}', space=vmem, size = 0x8000, scoped, tag = 'input window, operand 1, single buffered']
    #allocation6 [shape = 's32[1]{0}', space=sflag, size = 0x4, scoped, tag = 'scoped memory for tpu_custom_call.1']
    #allocation7 [shape = 'u8[32768]{0}', space=vmem, size = 0x8000, scoped, tag = 'input window, operand 2, single buffered']
    #allocation8 [shape = 'u8[2048]{0}', space=vmem, size = 0x800, scoped, tag = 'output window, operand 0, single buffered']
    #allocation9 [shape = 'u8[2048]{0}', space=vmem, size = 0x800, scoped, tag = 'output window, operand 1, single buffered']
    #allocation10 [shape = 's32[1]{0}', space=sflag, size = 0x4, scoped, tag = 'scoped memory for tpu_custom_call.1']
    %11 = vsyncpa [#allocation3], 0
    %12 = vsyncpa [#allocation6], 0
    %13 = vsyncpa [#allocation4], 0
    %14 = vsyncpa [#allocation10], 0
    // Predicated region
    $region2: #{tpu_custom_call.1} parent=1 // pred_check
      _
    $region3: #{tpu_custom_call.1} parent=1 // pred_check_branch
      %16 = sbr.rel (0) target = $region5
    $region4: #{tpu_custom_call.1} parent=1 // pred_region
      %s18 = ssub.s32 64, 64
      %19 = vsyncadd [#allocation3], %s18
      %s21 = sshll.u32 [#allocation2], 4
      %s22 = int_to_ptr.vmem [resolvable:$true] %s21
      %24 = dma.hbm_to_vmem [thread:$0]  %s0, 64, %s22, [#allocation3]
    $region5: #{tpu_custom_call.1} parent=1 // pred_fallthru
      _
    // Predicated region
    $region6: #{tpu_custom_call.1} parent=1 // pred_check
      _
    $region7: #{tpu_custom_call.1} parent=1 // pred_check_branch
      %26 = sbr.rel (0) target = $region9
    $region8: #{tpu_custom_call.1} parent=1 // pred_region
      %s28 = ssub.s32 1024, 1024
      %29 = vsyncadd [#allocation6], %s28
      %s30 = sshll.u32 [#allocation5], 4
      %s31 = int_to_ptr.vmem [resolvable:$true] %s30
      %36 = dma.hbm_to_vmem [thread:$0]  %s1, 1024, %s31, [#allocation6], 64, 64, 4
    $region9: #{tpu_custom_call.1} parent=1 // pred_fallthru
      _
    // Predicated region
    $region10: #{tpu_custom_call.1} parent=1 // pred_check
      _
    $region11: #{tpu_custom_call.1} parent=1 // pred_check_branch
      %38 = sbr.rel (0) target = $region13
    $region12: #{tpu_custom_call.1} parent=1 // pred_region
      %s40 = ssub.s32 1024, 1024
      %41 = vsyncadd [#allocation6], %s40
      %s42 = sshll.u32 [#allocation7], 4
      %s43 = int_to_ptr.vmem [resolvable:$true] %s42
      %48 = dma.hbm_to_vmem [thread:$0]  %s2, 1024, %s43, [#allocation6], 64, 64, 4
    $region13: #{tpu_custom_call.1} parent=1 // pred_fallthru
      _
    // Predicated region
    $region14: #{tpu_custom_call.1} parent=1 // pred_check
      _
    $region15: #{tpu_custom_call.1} parent=1 // pred_check_branch
      %50 = sbr.rel (0) target = $region17
    $region16: #{tpu_custom_call.1} parent=1 // pred_region
      _
    $region17: #{tpu_custom_call.1} parent=1 // pred_fallthru
      _
    // Predicated region
    $region18: #{tpu_custom_call.1} parent=1 // pred_check
      _
    $region19: #{tpu_custom_call.1} parent=1 // pred_check_branch
      %52 = sbr.rel (0) target = $region21
    $region20: #{tpu_custom_call.1} parent=1 // pred_region
      %53 = dma.done [#allocation3], 64
    $region21: #{tpu_custom_call.1} parent=1 // pred_fallthru
      _
    // Predicated region
    $region22: #{tpu_custom_call.1} parent=1 // pred_check
      _
    $region23: #{tpu_custom_call.1} parent=1 // pred_check_branch
      %55 = sbr.rel (0) target = $region25
    $region24: #{tpu_custom_call.1} parent=1 // pred_region
      %56 = dma.done [#allocation6], 1024
    $region25: #{tpu_custom_call.1} parent=1 // pred_fallthru
      _
    // Predicated region
    $region26: #{tpu_custom_call.1} parent=1 // pred_check
      _
    $region27: #{tpu_custom_call.1} parent=1 // pred_check_branch
      %58 = sbr.rel (0) target = $region29
    $region28: #{tpu_custom_call.1} parent=1 // pred_region
      %59 = dma.done [#allocation6], 1024
    $region29: #{tpu_custom_call.1} parent=1 // pred_fallthru
      _
    %v61 = vld [vmem:[#allocation2] sm:$0xf]
    %v62 = vld [vmem:[#allocation5] sm:$0xf]
    %v63 = vld [vmem:[#allocation5 + $0x4] sm:$0xf]
    %v64 = vld [vmem:[#allocation5 + $0x8] sm:$0xf]
    %v65 = vld [vmem:[#allocation5 + $0xc] sm:$0xf]
    %v66 = vld [vmem:[#allocation5 + $0x10] sm:$0xf]
    %v67 = vld [vmem:[#allocation5 + $0x14] sm:$0xf]
    %v68 = vld [vmem:[#allocation5 + $0x18] sm:$0xf]
    %v69 = vld [vmem:[#allocation5 + $0x1c] sm:$0xf]
    %v70 = vld [vmem:[#allocation5 + $0x20] sm:$0xf]
    %v71 = vld [vmem:[#allocation5 + $0x24] sm:$0xf]
    %v72 = vld [vmem:[#allocation5 + $0x28] sm:$0xf]
    %v73 = vld [vmem:[#allocation5 + $0x2c] sm:$0xf]
    %v74 = vld [vmem:[#allocation5 + $0x30] sm:$0xf]
    %v75 = vld [vmem:[#allocation5 + $0x34] sm:$0xf]
    %v76 = vld [vmem:[#allocation5 + $0x38] sm:$0xf]
    %v77 = vld [vmem:[#allocation5 + $0x3c] sm:$0xf]
    %v78 = vld [vmem:[%s3] sm:$0x1]
    %v80 = vlaneseq
    %v81 = vshrl.u32 %v80, 7
    %v82 = vsub.s32 0, %v81
    %v83 = vrot.slane %v78, %v82
    %v101 = vunpack.c.l.b16 %v62
    %v102 = vunpack.c.l.b16 %v63
    %v103 = vunpack.c.l.b16 %v64
    %v104 = vunpack.c.l.b16 %v65
    %v105 = vunpack.c.l.b16 %v66
    %v106 = vunpack.c.l.b16 %v67
    %v107 = vunpack.c.l.b16 %v68
    %v108 = vunpack.c.l.b16 %v69
    %v109 = vunpack.c.l.b16 %v70
    %v110 = vunpack.c.l.b16 %v71
    %v111 = vunpack.c.l.b16 %v72
    %v112 = vunpack.c.l.b16 %v73
    %v113 = vunpack.c.l.b16 %v74
    %v114 = vunpack.c.l.b16 %v75
    %v115 = vunpack.c.l.b16 %v76
    %v116 = vunpack.c.l.b16 %v77
    %v117 = vpack.c.b16 %v102, %v101
    %v118 = vpack.c.b16 %v104, %v103
    %v119 = vpack.c.b16 %v106, %v105
    %v120 = vpack.c.b16 %v108, %v107
    %v121 = vpack.c.b16 %v110, %v109
    %v122 = vpack.c.b16 %v112, %v111
    %v123 = vpack.c.b16 %v114, %v113
    %v124 = vpack.c.b16 %v116, %v115
    %133 = vmatprep.subr.bf16.mxu0 0
    %134 = vmatpush1.bf16.msra.mxu0 %v124
    %135 = vmatprep.subr.bf16.mxu0 0
    %136 = vmatpush1.bf16.msra.mxu0 %v123
    %137 = vmatprep.subr.bf16.mxu0 0
    %138 = vmatpush1.bf16.msra.mxu0 %v122
    %139 = vmatprep.subr.bf16.mxu0 0
    %140 = vmatpush1.bf16.msra.mxu0 %v121
    %141 = vmatprep.subr.bf16.mxu0 0
    %142 = vmatpush1.bf16.msra.mxu0 %v120
    %143 = vmatprep.subr.bf16.mxu0 0
    %144 = vmatpush1.bf16.msra.mxu0 %v119
    %145 = vmatprep.subr.bf16.mxu0 0
    %146 = vmatpush1.bf16.msra.mxu0 %v118
    %147 = vmatprep.subr.bf16.mxu0 0
    %148 = vmatpush1.bf16.msra.mxu0 %v117
    %149 = vmatprep.subr.bf16.mxu0 0
    %150 = vmatpush2.bf16.msra.mxu0 0
    %151 = vmatprep.subr.bf16.mxu0 0
    %152 = vmatpush2.bf16.msra.mxu0 0
    %153 = vmatprep.subr.bf16.mxu0 0
    %154 = vmatpush2.bf16.msra.mxu0 0
    %155 = vmatprep.subr.bf16.mxu0 0
    %156 = vmatpush2.bf16.msra.mxu0 0
    %157 = vmatprep.subr.bf16.mxu0 0
    %158 = vmatpush2.bf16.msra.mxu0 0
    %159 = vmatprep.subr.bf16.mxu0 0
    %160 = vmatpush2.bf16.msra.mxu0 0
    %161 = vmatprep.subr.bf16.mxu0 0
    %162 = vmatpush2.bf16.msra.mxu0 0
    %163 = vmatprep.subr.bf16.mxu0 0
    %164 = vmatpush2.bf16.msra.mxu0 0
    %165 = vmatprep.mubr.bf16.mxu0 0
    %166 = vmatmul.mubr.bf16.gmra.mxu0 %v61
    %v167 = vpop.f32.mrf.mxu0
    %v168 = vadd.f32 %v83, %v167
    %v169 = vpop.f32.mrf.mxu0
    %v170 = vpop.f32.mrf.mxu0
    %v171 = vpop.f32.mrf.mxu0
    %172 = vdwg.mxu0
    %v173 = vmul.f32 %v168, 0.5
    %v174 = vtanh.pop %v173
    %v175 = vmul.f32 %v174, 0.5
    %v176 = vadd.f32 %v175, 0.5
    %v177 = vpack.c.bf16 %v176, %v176
    %178 = vst [vmem:[#allocation9] sm:$0xf] %v177
    %v179 = vld [vmem:[#allocation7] sm:$0xf]
    %v180 = vld [vmem:[#allocation7 + $0x4] sm:$0xf]
    %v181 = vld [vmem:[#allocation7 + $0x8] sm:$0xf]
    %v182 = vld [vmem:[#allocation7 + $0xc] sm:$0xf]
    %v183 = vld [vmem:[#allocation7 + $0x10] sm:$0xf]
    %v184 = vld [vmem:[#allocation7 + $0x14] sm:$0xf]
    %v185 = vld [vmem:[#allocation7 + $0x18] sm:$0xf]
    %v186 = vld [vmem:[#allocation7 + $0x1c] sm:$0xf]
    %v187 = vld [vmem:[#allocation7 + $0x20] sm:$0xf]
    %v188 = vld [vmem:[#allocation7 + $0x24] sm:$0xf]
    %v189 = vld [vmem:[#allocation7 + $0x28] sm:$0xf]
    %v190 = vld [vmem:[#allocation7 + $0x2c] sm:$0xf]
    %v191 = vld [vmem:[#allocation7 + $0x30] sm:$0xf]
    %v192 = vld [vmem:[#allocation7 + $0x34] sm:$0xf]
    %v193 = vld [vmem:[#allocation7 + $0x38] sm:$0xf]
    %v194 = vld [vmem:[#allocation7 + $0x3c] sm:$0xf]
    %v211 = vunpack.c.l.b16 %v179
    %v212 = vunpack.c.l.b16 %v180
    %v213 = vunpack.c.l.b16 %v181
    %v214 = vunpack.c.l.b16 %v182
    %v215 = vunpack.c.l.b16 %v183
    %v216 = vunpack.c.l.b16 %v184
    %v217 = vunpack.c.l.b16 %v185
    %v218 = vunpack.c.l.b16 %v186
    %v219 = vunpack.c.l.b16 %v187
    %v220 = vunpack.c.l.b16 %v188
    %v221 = vunpack.c.l.b16 %v189
    %v222 = vunpack.c.l.b16 %v190
    %v223 = vunpack.c.l.b16 %v191
    %v224 = vunpack.c.l.b16 %v192
    %v225 = vunpack.c.l.b16 %v193
    %v226 = vunpack.c.l.b16 %v194
    %v227 = vpack.c.b16 %v212, %v211
    %v228 = vpack.c.b16 %v214, %v213
    %v229 = vpack.c.b16 %v216, %v215
    %v230 = vpack.c.b16 %v218, %v217
    %v231 = vpack.c.b16 %v220, %v219
    %v232 = vpack.c.b16 %v222, %v221
    %v233 = vpack.c.b16 %v224, %v223
    %v234 = vpack.c.b16 %v226, %v225
    %243 = vmatprep.subr.bf16.mxu0 0
    %244 = vmatpush1.bf16.msra.mxu0 %v234
    %245 = vmatprep.subr.bf16.mxu0 0
    %246 = vmatpush1.bf16.msra.mxu0 %v233
    %247 = vmatprep.subr.bf16.mxu0 0
    %248 = vmatpush1.bf16.msra.mxu0 %v232
    %249 = vmatprep.subr.bf16.mxu0 0
    %250 = vmatpush1.bf16.msra.mxu0 %v231
    %251 = vmatprep.subr.bf16.mxu0 0
    %252 = vmatpush1.bf16.msra.mxu0 %v230
    %253 = vmatprep.subr.bf16.mxu0 0
    %254 = vmatpush1.bf16.msra.mxu0 %v229
    %255 = vmatprep.subr.bf16.mxu0 0
    %256 = vmatpush1.bf16.msra.mxu0 %v228
    %257 = vmatprep.subr.bf16.mxu0 0
    %258 = vmatpush1.bf16.msra.mxu0 %v227
    %259 = vmatprep.subr.bf16.mxu0 0
    %260 = vmatpush2.bf16.msra.mxu0 0
    %261 = vmatprep.subr.bf16.mxu0 0
    %262 = vmatpush2.bf16.msra.mxu0 0
    %263 = vmatprep.subr.bf16.mxu0 0
    %264 = vmatpush2.bf16.msra.mxu0 0
    %265 = vmatprep.subr.bf16.mxu0 0
    %266 = vmatpush2.bf16.msra.mxu0 0
    %267 = vmatprep.subr.bf16.mxu0 0
    %268 = vmatpush2.bf16.msra.mxu0 0
    %269 = vmatprep.subr.bf16.mxu0 0
    %270 = vmatpush2.bf16.msra.mxu0 0
    %271 = vmatprep.subr.bf16.mxu0 0
    %272 = vmatpush2.bf16.msra.mxu0 0
    %273 = vmatprep.subr.bf16.mxu0 0
    %274 = vmatpush2.bf16.msra.mxu0 0
    %275 = vmatprep.mubr.bf16.mxu0 0
    %276 = vmatmul.mubr.bf16.gmra.mxu0 %v177
    %v277 = vpop.f32.mrf.mxu0
    %v278 = vadd.f32 0.0, %v277
    %v279 = vpop.f32.mrf.mxu0
    %v280 = vpop.f32.mrf.mxu0
    %v281 = vpop.f32.mrf.mxu0
    %282 = vdwg.mxu0
    %v283 = vmul.f32 %v278, 0.5
    %v284 = vtanh.pop %v283
    %v285 = vmul.f32 %v284, 0.5
    %v286 = vadd.f32 %v285, 0.5
    %v287 = vpack.c.bf16 %v286, %v286
    %288 = vst [vmem:[#allocation8] sm:$0xf] %v287
    // Predicated region
    $region30: #{tpu_custom_call.1} parent=1 // pred_check
      _
    $region31: #{tpu_custom_call.1} parent=1 // pred_check_branch
      %290 = sbr.rel (0) target = $region33
    $region32: #{tpu_custom_call.1} parent=1 // pred_region
      %s292 = ssub.s32 64, 64
      %293 = vsyncadd [#allocation4], %s292
      %s295 = sshll.u32 [#allocation8], 4
      %s296 = int_to_ptr.vmem [resolvable:$true] %s295
      %298 = dma.vmem_to_hbm [thread:$0]  %s296, 64, %s4, [#allocation4]
    $region33: #{tpu_custom_call.1} parent=1 // pred_fallthru
      _
    // Predicated region
    $region34: #{tpu_custom_call.1} parent=1 // pred_check
      _
    $region35: #{tpu_custom_call.1} parent=1 // pred_check_branch
      %300 = sbr.rel (0) target = $region37
    $region36: #{tpu_custom_call.1} parent=1 // pred_region
      %s302 = ssub.s32 64, 64
      %303 = vsyncadd [#allocation10], %s302
      %s305 = sshll.u32 [#allocation9], 4
      %s306 = int_to_ptr.vmem [resolvable:$true] %s305
      %308 = dma.vmem_to_hbm [thread:$0]  %s306, 64, %s5, [#allocation10]
    $region37: #{tpu_custom_call.1} parent=1 // pred_fallthru
      _
    // Predicated region
    $region38: #{tpu_custom_call.1} parent=1 // pred_check
      _
    $region39: #{tpu_custom_call.1} parent=1 // pred_check_branch
      %310 = sbr.rel (0) target = $region41
    $region40: #{tpu_custom_call.1} parent=1 // pred_region
      %311 = dma.done [#allocation4], 64
    $region41: #{tpu_custom_call.1} parent=1 // pred_fallthru
      _
    // Predicated region
    $region42: #{tpu_custom_call.1} parent=1 // pred_check
      _
    $region43: #{tpu_custom_call.1} parent=1 // pred_check_branch
      %313 = sbr.rel (0) target = $region45
    $region44: #{tpu_custom_call.1} parent=1 // pred_region
      %314 = dma.done [#allocation10], 64
    $region45: #{tpu_custom_call.1} parent=1 // pred_fallthru
      _
    %315 = vsyncpa [#allocation3], 1
    %316 = vsyncpa [#allocation6], 1
    %317 = vsyncpa [#allocation4], 1
    %318 = vsyncpa [#allocation10], 1

</llo_original>
